<compile_context>
chip_gen: v7x
topology: tpu7x:2x2x1
jax: 0.10.0
libtpu: 0.0.40
codegen_flags: <defaults>
</compile_context>

<pallas_src>
import math

import jax
import jax.numpy as jnp
from jax.experimental import pallas as pl
from jax.experimental.pallas import tpu as pltpu


def _silu(h):
    # SiLU(x) = x * sigmoid(x), sigmoid(x) = 0.5 * (1 + tanh(0.5 * x)).
    # Single EUP op (tanh); add/mul ride the VPU. Stays in f32.
    return h * (0.5 * (1.0 + jnp.tanh(0.5 * h)))


def _mlp_kernel(x_ref,
                w1_ref, b1_ref,
                w2_ref, b2_ref,
                w3_ref, b3_ref,
                w4_ref, b4_ref,
                o_ref):
    # Feature-major: x_ref is (input_dim, tb), weights are (out, in) [PyTorch
    # layout, bf16], biases are (out, 1) f32. All dots put the batch tile on
    # the MXU N dimension (lane-dense), accumulate in f32.
    x = x_ref[...].astype(jnp.bfloat16)

    h = jnp.dot(w1_ref[...], x, preferred_element_type=jnp.float32) + b1_ref[...]
    h = _silu(h)
    h = jnp.dot(w2_ref[...], h.astype(jnp.bfloat16),
                preferred_element_type=jnp.float32) + b2_ref[...]
    h = _silu(h)
    h = jnp.dot(w3_ref[...], h.astype(jnp.bfloat16),
                preferred_element_type=jnp.float32) + b3_ref[...]
    h = _silu(h)
    h = jnp.dot(w4_ref[...], h.astype(jnp.bfloat16),
                preferred_element_type=jnp.float32) + b4_ref[...]

    o_ref[...] = h.astype(o_ref.dtype)


def prepare_params(params):
    """Fold the per-column input scaling into W1 and cast weights to bf16.

    params: PyTorch-layout f32 weights w_i (out, in) and biases b_i (out,).
    Returns kernel-ready params: bf16 (out, in) weights, f32 (out, 1) biases.
    y = W1 @ (s * x) == (W1 * s[None, :]) @ x  -- exact f32 constant folding.
    """
    input_dim = params["w1"].shape[1]
    assert input_dim >= 4, "Model scales columns 0..3; input_dim must be >= 4"
    scale = jnp.concatenate([
        jnp.array([1.0 / 4.8, 1.0 / 5.0, 1.0 / 0.4, 1.0 / 4.0], jnp.float32),
        jnp.ones((input_dim - 4,), jnp.float32),
    ])
    out = {}
    out["w1"] = (params["w1"] * scale[None, :]).astype(jnp.bfloat16)
    for i in (2, 3, 4):
        out[f"w{i}"] = params[f"w{i}"].astype(jnp.bfloat16)
    for i in (1, 2, 3, 4):
        out[f"b{i}"] = params[f"b{i}"].reshape(-1, 1).astype(jnp.float32)
    return out


def model_forward(x, kparams, *, block_b=8192):
    """x: (B, input_dim) float32 (PyTorch row-major convention).

    kparams: output of prepare_params().
    block_b: batch tile (lanes); multiple of 128. Per-tile VMEM use at 8192 is
             well under v5e's 16 MiB scoped default even double-buffered.
    """
    B, input_dim = x.shape
    hidden_dim = kparams["w1"].shape[0]
    output_dim = kparams["w4"].shape[0]
    assert block_b % 128 == 0

    # Batch on lanes: feed the kernel x^T = (input_dim, B), get out^T back.
    xt = x.T

    tb = B if B <= block_b else block_b
    grid = (pl.cdiv(B, tb),)

    # x / out move with the grid index along the batch (lane) axis; weights &
    # biases are tiny (<4 KiB) and use constant index_maps -> VMEM-resident.
    x_spec = pl.BlockSpec((input_dim, tb), lambda i: (0, i))
    out_spec = pl.BlockSpec((output_dim, tb), lambda i: (0, i))

    def _const_spec(shape):
        return pl.BlockSpec(shape, lambda i: (0, 0))

    in_specs = [
        x_spec,
        _const_spec((hidden_dim, input_dim)),  _const_spec((hidden_dim, 1)),   # w1, b1
        _const_spec((hidden_dim, hidden_dim)), _const_spec((hidden_dim, 1)),   # w2, b2
        _const_spec((hidden_dim, hidden_dim)), _const_spec((hidden_dim, 1)),   # w3, b3
        _const_spec((output_dim, hidden_dim)), _const_spec((output_dim, 1)),   # w4, b4
    ]

    out_t = pl.pallas_call(
        _mlp_kernel,
        out_shape=jax.ShapeDtypeStruct((output_dim, B), jnp.float32),
        grid=grid,
        in_specs=in_specs,
        out_specs=out_spec,
        compiler_params=pltpu.CompilerParams(
            dimension_semantics=("parallel",),
        ),
    )(xt,
      kparams["w1"], kparams["b1"],
      kparams["w2"], kparams["b2"],
      kparams["w3"], kparams["b3"],
      kparams["w4"], kparams["b4"])

    return out_t.T  # back to (B, output_dim)


def init_params(key, input_dim, hidden_dim, output_dim):
    """Deterministic init mirroring PyTorch nn.Linear default U(-1/sqrt(fan_in), +).

    Weights are kept in PyTorch's native (out, in) layout; biases are (out,).
    """
    dims = [(input_dim, hidden_dim),
            (hidden_dim, hidden_dim),
            (hidden_dim, hidden_dim),
            (hidden_dim, output_dim)]
    params = {}
    for i, (fan_in, fan_out) in enumerate(dims, start=1):
        key, kw, kb = jax.random.split(key, 3)
        bound = 1.0 / math.sqrt(fan_in)
        params[f"w{i}"] = jax.random.uniform(
            kw, (fan_out, fan_in), jnp.float32, -bound, bound)
        params[f"b{i}"] = jax.random.uniform(
            kb, (fan_out,), jnp.float32, -bound, bound)
    return params


def reference_forward(x, params):
    """Pure-JAX f32 reference (exact sigmoid, unfolded scaling, unfused)."""
    scale = jnp.ones((x.shape[1],), jnp.float32)
    scale = scale.at[0].set(1.0 / 4.8).at[1].set(1.0 / 5.0)
    scale = scale.at[2].set(1.0 / 0.4).at[3].set(1.0 / 4.0)
    h = x * scale[None, :]
    h = jax.nn.silu(h @ params["w1"].T + params["b1"][None, :])
    h = jax.nn.silu(h @ params["w2"].T + params["b2"][None, :])
    h = jax.nn.silu(h @ params["w3"].T + params["b3"][None, :])
    return h @ params["w4"].T + params["b4"][None, :]


if __name__ == "__main__":
    input_dim, hidden_dim, output_dim = 4, 32, 4
    batch = 8

    key = jax.random.PRNGKey(0)
    key, kx = jax.random.split(key)
    x = jax.random.normal(kx, (batch, input_dim), jnp.float32) * 3.0

    params = init_params(key, input_dim, hidden_dim, output_dim)
    kparams = prepare_params(params)

    out = model_forward(x, kparams)
    out = jax.block_until_ready(out)

    ref = reference_forward(x, params)
    assert out.shape == (batch, output_dim)
    # Tolerance accounts for bf16 matmul operands (f32 accumulation) compounded
    # over 4 layers; the SiLU itself is exact (tanh form, f32).
    assert jnp.allclose(out, ref, atol=5e-2, rtol=5e-2), "mismatch vs JAX reference"

    print("KERNEL_OK")
</pallas_src>

<mosaic_0001>
module attributes {stable_mosaic.version = 11 : i64} {
  func.func @_mlp_kernel(%arg0: i32, %arg1: memref<4x8xf32, #tpu.memory_space<vmem>>, %arg2: memref<32x4xbf16, #tpu.memory_space<vmem>>, %arg3: memref<32x1xf32, #tpu.memory_space<vmem>>, %arg4: memref<32x32xbf16, #tpu.memory_space<vmem>>, %arg5: memref<32x1xf32, #tpu.memory_space<vmem>>, %arg6: memref<32x32xbf16, #tpu.memory_space<vmem>>, %arg7: memref<32x1xf32, #tpu.memory_space<vmem>>, %arg8: memref<4x32xbf16, #tpu.memory_space<vmem>>, %arg9: memref<4x1xf32, #tpu.memory_space<vmem>>, %arg10: memref<4x8xf32, #tpu.memory_space<vmem>>) attributes {dimension_semantics = [#tpu.dimension_semantics<parallel>], iteration_bounds = array<i64: 1>, scalar_prefetch = 0 : i64, scratch_operands = 0 : i64, tpu.core_type = #tpu.core_type<tc>, window_params = [{transform_indices = @transform_0, window_bounds = array<i64: 4, 8>}, {pipeline_mode = #tpu.pipeline_mode<synchronous>, transform_indices = @transform_1, window_bounds = array<i64: 32, 4>}, {pipeline_mode = #tpu.pipeline_mode<synchronous>, transform_indices = @transform_2, window_bounds = array<i64: 32, 1>}, {pipeline_mode = #tpu.pipeline_mode<synchronous>, transform_indices = @transform_3, window_bounds = array<i64: 32, 32>}, {pipeline_mode = #tpu.pipeline_mode<synchronous>, transform_indices = @transform_4, window_bounds = array<i64: 32, 1>}, {pipeline_mode = #tpu.pipeline_mode<synchronous>, transform_indices = @transform_5, window_bounds = array<i64: 32, 32>}, {pipeline_mode = #tpu.pipeline_mode<synchronous>, transform_indices = @transform_6, window_bounds = array<i64: 32, 1>}, {pipeline_mode = #tpu.pipeline_mode<synchronous>, transform_indices = @transform_7, window_bounds = array<i64: 4, 32>}, {pipeline_mode = #tpu.pipeline_mode<synchronous>, transform_indices = @transform_8, window_bounds = array<i64: 4, 1>}, {transform_indices = @transform_9, window_bounds = array<i64: 4, 8>}]} {
    %c0 = arith.constant 0 : index
    %c0_0 = arith.constant 0 : index
    %0 = vector.load %arg1[%c0, %c0_0] : memref<4x8xf32, #tpu.memory_space<vmem>>, vector<4x8xf32>
    %1 = arith.truncf %0 : vector<4x8xf32> to vector<4x8xbf16>
    %c0_1 = arith.constant 0 : index
    %c0_2 = arith.constant 0 : index
    %2 = vector.load %arg2[%c0_1, %c0_2] : memref<32x4xbf16, #tpu.memory_space<vmem>>, vector<32x4xbf16>
    %cst = arith.constant dense<0.000000e+00> : vector<32x8xf32>
    %3 = tpu.matmul %2, %1, %cst {dimension_numbers = #tpu.dot_dimension_numbers<[1], [0], [0], [1], [0, 0, 1, 1], [], []>} : vector<32x4xbf16>, vector<4x8xbf16>, vector<32x8xf32> -> vector<32x8xf32>
    %c0_3 = arith.constant 0 : index
    %c0_4 = arith.constant 0 : index
    %4 = vector.load %arg3[%c0_3, %c0_4] : memref<32x1xf32, #tpu.memory_space<vmem>>, vector<32x1xf32>
    %5 = vector.broadcast %4 : vector<32x1xf32> to vector<32x8xf32>
    %6 = arith.addf %3, %5 : vector<32x8xf32>
    %cst_5 = arith.constant 5.000000e-01 : f32
    %7 = vector.broadcast %cst_5 : f32 to vector<32x8xf32>
    %8 = arith.mulf %7, %6 : vector<32x8xf32>
    %9 = math.tanh %8 : vector<32x8xf32>
    %cst_6 = arith.constant 1.000000e+00 : f32
    %10 = vector.broadcast %cst_6 : f32 to vector<32x8xf32>
    %11 = arith.addf %10, %9 : vector<32x8xf32>
    %cst_7 = arith.constant 5.000000e-01 : f32
    %12 = vector.broadcast %cst_7 : f32 to vector<32x8xf32>
    %13 = arith.mulf %12, %11 : vector<32x8xf32>
    %14 = arith.mulf %6, %13 : vector<32x8xf32>
    %c0_8 = arith.constant 0 : index
    %c0_9 = arith.constant 0 : index
    %15 = vector.load %arg4[%c0_8, %c0_9] : memref<32x32xbf16, #tpu.memory_space<vmem>>, vector<32x32xbf16>
    %16 = arith.truncf %14 : vector<32x8xf32> to vector<32x8xbf16>
    %cst_10 = arith.constant dense<0.000000e+00> : vector<32x8xf32>
    %17 = tpu.matmul %15, %16, %cst_10 {dimension_numbers = #tpu.dot_dimension_numbers<[1], [0], [0], [1], [0, 0, 1, 1], [], []>} : vector<32x32xbf16>, vector<32x8xbf16>, vector<32x8xf32> -> vector<32x8xf32>
    %c0_11 = arith.constant 0 : index
    %c0_12 = arith.constant 0 : index
    %18 = vector.load %arg5[%c0_11, %c0_12] : memref<32x1xf32, #tpu.memory_space<vmem>>, vector<32x1xf32>
    %19 = vector.broadcast %18 : vector<32x1xf32> to vector<32x8xf32>
    %20 = arith.addf %17, %19 : vector<32x8xf32>
    %cst_13 = arith.constant 5.000000e-01 : f32
    %21 = vector.broadcast %cst_13 : f32 to vector<32x8xf32>
    %22 = arith.mulf %21, %20 : vector<32x8xf32>
    %23 = math.tanh %22 : vector<32x8xf32>
    %cst_14 = arith.constant 1.000000e+00 : f32
    %24 = vector.broadcast %cst_14 : f32 to vector<32x8xf32>
    %25 = arith.addf %24, %23 : vector<32x8xf32>
    %cst_15 = arith.constant 5.000000e-01 : f32
    %26 = vector.broadcast %cst_15 : f32 to vector<32x8xf32>
    %27 = arith.mulf %26, %25 : vector<32x8xf32>
    %28 = arith.mulf %20, %27 : vector<32x8xf32>
    %c0_16 = arith.constant 0 : index
    %c0_17 = arith.constant 0 : index
    %29 = vector.load %arg6[%c0_16, %c0_17] : memref<32x32xbf16, #tpu.memory_space<vmem>>, vector<32x32xbf16>
    %30 = arith.truncf %28 : vector<32x8xf32> to vector<32x8xbf16>
    %cst_18 = arith.constant dense<0.000000e+00> : vector<32x8xf32>
    %31 = tpu.matmul %29, %30, %cst_18 {dimension_numbers = #tpu.dot_dimension_numbers<[1], [0], [0], [1], [0, 0, 1, 1], [], []>} : vector<32x32xbf16>, vector<32x8xbf16>, vector<32x8xf32> -> vector<32x8xf32>
    %c0_19 = arith.constant 0 : index
    %c0_20 = arith.constant 0 : index
    %32 = vector.load %arg7[%c0_19, %c0_20] : memref<32x1xf32, #tpu.memory_space<vmem>>, vector<32x1xf32>
    %33 = vector.broadcast %32 : vector<32x1xf32> to vector<32x8xf32>
    %34 = arith.addf %31, %33 : vector<32x8xf32>
    %cst_21 = arith.constant 5.000000e-01 : f32
    %35 = vector.broadcast %cst_21 : f32 to vector<32x8xf32>
    %36 = arith.mulf %35, %34 : vector<32x8xf32>
    %37 = math.tanh %36 : vector<32x8xf32>
    %cst_22 = arith.constant 1.000000e+00 : f32
    %38 = vector.broadcast %cst_22 : f32 to vector<32x8xf32>
    %39 = arith.addf %38, %37 : vector<32x8xf32>
    %cst_23 = arith.constant 5.000000e-01 : f32
    %40 = vector.broadcast %cst_23 : f32 to vector<32x8xf32>
    %41 = arith.mulf %40, %39 : vector<32x8xf32>
    %42 = arith.mulf %34, %41 : vector<32x8xf32>
    %c0_24 = arith.constant 0 : index
    %c0_25 = arith.constant 0 : index
    %43 = vector.load %arg8[%c0_24, %c0_25] : memref<4x32xbf16, #tpu.memory_space<vmem>>, vector<4x32xbf16>
    %44 = arith.truncf %42 : vector<32x8xf32> to vector<32x8xbf16>
    %cst_26 = arith.constant dense<0.000000e+00> : vector<4x8xf32>
    %45 = tpu.matmul %43, %44, %cst_26 {dimension_numbers = #tpu.dot_dimension_numbers<[1], [0], [0], [1], [0, 0, 1, 1], [], []>} : vector<4x32xbf16>, vector<32x8xbf16>, vector<4x8xf32> -> vector<4x8xf32>
    %c0_27 = arith.constant 0 : index
    %c0_28 = arith.constant 0 : index
    %46 = vector.load %arg9[%c0_27, %c0_28] : memref<4x1xf32, #tpu.memory_space<vmem>>, vector<4x1xf32>
    %47 = vector.broadcast %46 : vector<4x1xf32> to vector<4x8xf32>
    %48 = arith.addf %45, %47 : vector<4x8xf32>
    %c0_29 = arith.constant 0 : index
    %c0_30 = arith.constant 0 : index
    %49 = vector.load %arg10[%c0_29, %c0_30] : memref<4x8xf32, #tpu.memory_space<vmem>>, vector<4x8xf32>
    tpu.vector_store %arg10[%c0_29, %c0_30], %48 {strides = array<i32>} : memref<4x8xf32, #tpu.memory_space<vmem>>, vector<4x8xf32>,
    return
  }
  func.func @transform_0(%arg0: i32) -> (i32, i32) {
    %c0_i32 = arith.constant 0 : i32
    %c0_i32_0 = arith.constant 0 : i32
    return %c0_i32, %arg0 : i32, i32
  }
  func.func @transform_1(%arg0: i32) -> (i32, i32) {
    %c0_i32 = arith.constant 0 : i32
    %c0_i32_0 = arith.constant 0 : i32
    %c0_i32_1 = arith.constant 0 : i32
    return %c0_i32, %c0_i32_0 : i32, i32
  }
  func.func @transform_2(%arg0: i32) -> (i32, i32) {
    %c0_i32 = arith.constant 0 : i32
    %c0_i32_0 = arith.constant 0 : i32
    %c0_i32_1 = arith.constant 0 : i32
    return %c0_i32, %c0_i32_0 : i32, i32
  }
  func.func @transform_3(%arg0: i32) -> (i32, i32) {
    %c0_i32 = arith.constant 0 : i32
    %c0_i32_0 = arith.constant 0 : i32
    %c0_i32_1 = arith.constant 0 : i32
    return %c0_i32, %c0_i32_0 : i32, i32
  }
  func.func @transform_4(%arg0: i32) -> (i32, i32) {
    %c0_i32 = arith.constant 0 : i32
    %c0_i32_0 = arith.constant 0 : i32
    %c0_i32_1 = arith.constant 0 : i32
    return %c0_i32, %c0_i32_0 : i32, i32
  }
  func.func @transform_5(%arg0: i32) -> (i32, i32) {
    %c0_i32 = arith.constant 0 : i32
    %c0_i32_0 = arith.constant 0 : i32
    %c0_i32_1 = arith.constant 0 : i32
    return %c0_i32, %c0_i32_0 : i32, i32
  }
  func.func @transform_6(%arg0: i32) -> (i32, i32) {
    %c0_i32 = arith.constant 0 : i32
    %c0_i32_0 = arith.constant 0 : i32
    %c0_i32_1 = arith.constant 0 : i32
    return %c0_i32, %c0_i32_0 : i32, i32
  }
  func.func @transform_7(%arg0: i32) -> (i32, i32) {
    %c0_i32 = arith.constant 0 : i32
    %c0_i32_0 = arith.constant 0 : i32
    %c0_i32_1 = arith.constant 0 : i32
    return %c0_i32, %c0_i32_0 : i32, i32
  }
  func.func @transform_8(%arg0: i32) -> (i32, i32) {
    %c0_i32 = arith.constant 0 : i32
    %c0_i32_0 = arith.constant 0 : i32
    %c0_i32_1 = arith.constant 0 : i32
    return %c0_i32, %c0_i32_0 : i32, i32
  }
  func.func @transform_9(%arg0: i32) -> (i32, i32) {
    %c0_i32 = arith.constant 0 : i32
    %c0_i32_0 = arith.constant 0 : i32
    return %c0_i32, %arg0 : i32, i32
  }
}

</mosaic_0001>

<llo_original>
// kernel: tpu_custom_call.1
$region0: #{tpu_custom_call.1}
  #allocation0 [shape = 'u32[]', space=smem, size = 0x4, offset = 0x4, fixed_abs, tag = 'smem constant byte address 0x4 - core index']
  #allocation1 [shape = 'u32[144,128]{1,0:T(1,128)}', space=vmem, size = 0x12000, scoped, tag = 'internal scratch']
  %s0 = inlined_call_operand.vmem [shape: f32[4,8], index: 0, kind: input, shape index: {}]
  %s1 = inlined_call_operand.vmem [shape: bf16[32,4], index: 1, kind: input, shape index: {}]
  %s2 = inlined_call_operand.vmem [shape: f32[32,1], index: 2, kind: input, shape index: {}]
  %s3 = inlined_call_operand.vmem [shape: bf16[32,32], index: 3, kind: input, shape index: {}]
  %s4 = inlined_call_operand.vmem [shape: f32[32,1], index: 4, kind: input, shape index: {}]
  %s5 = inlined_call_operand.vmem [shape: bf16[32,32], index: 5, kind: input, shape index: {}]
  %s6 = inlined_call_operand.vmem [shape: f32[32,1], index: 6, kind: input, shape index: {}]
  %s7 = inlined_call_operand.vmem [shape: bf16[4,32], index: 7, kind: input, shape index: {}]
  %s8 = inlined_call_operand.vmem [shape: f32[4,1], index: 8, kind: input, shape index: {}]
  %s9 = inlined_call_operand.hbm [shape: f32[4,8], index: 9, kind: output, shape index: {}]
  %s10 = sld [smem:[#allocation0]]
  $region46: #{tpu_custom_call.1} parent=0
    _
  %s12 = ssub.s32 1, %s10
  %s13 = scalar_select 0, %s12, %s10
  $region1: #{tpu_custom_call.1} parent=0
    #allocation2 [shape = 'u8[2048]{0}', space=vmem, size = 0x800, scoped, tag = 'output window, operand 0, single buffered']
    #allocation3 [shape = 's32[1]{0}', space=sflag, size = 0x4, scoped, tag = 'scoped memory for tpu_custom_call.1']
    %14 = vsyncpa [#allocation3], 0
    // Predicated region
    $region2: #{tpu_custom_call.1} parent=1 // pred_check
      _
    $region3: #{tpu_custom_call.1} parent=1 // pred_check_branch
      %16 = sbr.rel (0) target = $region5
    $region4: #{tpu_custom_call.1} parent=1 // pred_region
      _
    $region5: #{tpu_custom_call.1} parent=1 // pred_fallthru
      _
    // Predicated region
    $region6: #{tpu_custom_call.1} parent=1 // pred_check
      _
    $region7: #{tpu_custom_call.1} parent=1 // pred_check_branch
      %18 = sbr.rel (0) target = $region9
    $region8: #{tpu_custom_call.1} parent=1 // pred_region
      _
    $region9: #{tpu_custom_call.1} parent=1 // pred_fallthru
      _
    // Predicated region
    $region10: #{tpu_custom_call.1} parent=1 // pred_check
      _
    $region11: #{tpu_custom_call.1} parent=1 // pred_check_branch
      %20 = sbr.rel (0) target = $region13
    $region12: #{tpu_custom_call.1} parent=1 // pred_region
      _
    $region13: #{tpu_custom_call.1} parent=1 // pred_fallthru
      _
    // Predicated region
    $region14: #{tpu_custom_call.1} parent=1 // pred_check
      _
    $region15: #{tpu_custom_call.1} parent=1 // pred_check_branch
      %22 = sbr.rel (0) target = $region17
    $region16: #{tpu_custom_call.1} parent=1 // pred_region
      _
    $region17: #{tpu_custom_call.1} parent=1 // pred_fallthru
      _
    // Predicated region
    $region18: #{tpu_custom_call.1} parent=1 // pred_check
      _
    $region19: #{tpu_custom_call.1} parent=1 // pred_check_branch
      %24 = sbr.rel (0) target = $region21
    $region20: #{tpu_custom_call.1} parent=1 // pred_region
      _
    $region21: #{tpu_custom_call.1} parent=1 // pred_fallthru
      _
    // Predicated region
    $region22: #{tpu_custom_call.1} parent=1 // pred_check
      _
    $region23: #{tpu_custom_call.1} parent=1 // pred_check_branch
      %26 = sbr.rel (0) target = $region25
    $region24: #{tpu_custom_call.1} parent=1 // pred_region
      _
    $region25: #{tpu_custom_call.1} parent=1 // pred_fallthru
      _
    // Predicated region
    $region26: #{tpu_custom_call.1} parent=1 // pred_check
      _
    $region27: #{tpu_custom_call.1} parent=1 // pred_check_branch
      %28 = sbr.rel (0) target = $region29
    $region28: #{tpu_custom_call.1} parent=1 // pred_region
      _
    $region29: #{tpu_custom_call.1} parent=1 // pred_fallthru
      _
    // Predicated region
    $region30: #{tpu_custom_call.1} parent=1 // pred_check
      _
    $region31: #{tpu_custom_call.1} parent=1 // pred_check_branch
      %30 = sbr.rel (0) target = $region33
    $region32: #{tpu_custom_call.1} parent=1 // pred_region
      _
    $region33: #{tpu_custom_call.1} parent=1 // pred_fallthru
      _
    // Predicated region
    $region34: #{tpu_custom_call.1} parent=1 // pred_check
      _
    $region35: #{tpu_custom_call.1} parent=1 // pred_check_branch
      %32 = sbr.rel (0) target = $region37
    $region36: #{tpu_custom_call.1} parent=1 // pred_region
      _
    $region37: #{tpu_custom_call.1} parent=1 // pred_fallthru
      _
    %v34 = vld [vmem:[%s0] sm:$0xf]
    %v35 = vpack.c.bf16 %v34, %v34
    %v36 = vld [vmem:[%s1] sm:$0xf]
    %v37 = vld [vmem:[%s1 + $0x4] sm:$0xf]
    %v38 = vld [vmem:[%s1 + $0x8] sm:$0xf]
    %v39 = vld [vmem:[%s1 + $0xc] sm:$0xf]
    %v40 = vld [vmem:[%s2] sm:$0xff]
    %v41 = vld [vmem:[%s2 + $0x8] sm:$0xff]
    %v42 = vld [vmem:[%s2 + $0x10] sm:$0xff]
    %v43 = vld [vmem:[%s2 + $0x18] sm:$0xff]
    %45 = vset.pattern.permute.xlu0 0
    %46 = vperm.xlu0 %45, %v40
    %v47 = vpop.permute.xlu0 %46
    %50 = vset.pattern.permute.xlu0 0
    %51 = vperm.xlu0 %50, %v41
    %v52 = vpop.permute.xlu0 %51
    %55 = vset.pattern.permute.xlu0 0
    %56 = vperm.xlu0 %55, %v42
    %v57 = vpop.permute.xlu0 %56
    %60 = vset.pattern.permute.xlu0 0
    %61 = vperm.xlu0 %60, %v43
    %v62 = vpop.permute.xlu0 %61
    %v68 = vunpack.c.l.b16 %v36
    %v69 = vunpack.c.l.b16 %v37
    %v70 = vunpack.c.l.b16 %v38
    %v71 = vunpack.c.l.b16 %v39
    %v72 = vpack.c.b16 %v69, %v68
    %v73 = vpack.c.b16 %v71, %v70
    %vm74 = vcmask 31744
    %v76 = vsel %vm74, %v72, 0
    %v79 = vsel %vm74, %v73, 0
    %vm81 = vcmask 1041408
    %v83 = vsel %vm81, %v35, 0
    %85 = vmatprep.subr.bf16.mxu0 0
    %86 = vmatpush1.bf16.msra.mxu0 %v83
    %87 = vmatprep.subr.bf16.mxu0 0
    %88 = vmatpush1.bf16.msra.mxu0 0
    %89 = vmatprep.subr.bf16.mxu0 0
    %90 = vmatpush1.bf16.msra.mxu0 0
    %91 = vmatprep.subr.bf16.mxu0 0
    %92 = vmatpush1.bf16.msra.mxu0 0
    %93 = vmatprep.subr.bf16.mxu0 0
    %94 = vmatpush1.bf16.msra.mxu0 0
    %95 = vmatprep.subr.bf16.mxu0 0
    %96 = vmatpush1.bf16.msra.mxu0 0
    %97 = vmatprep.subr.bf16.mxu0 0
    %98 = vmatpush1.bf16.msra.mxu0 0
    %99 = vmatprep.subr.bf16.mxu0 0
    %100 = vmatpush1.bf16.msra.mxu0 0
    %101 = vmatprep.subr.bf16.mxu0 0
    %102 = vmatpush1.bf16.msra.mxu0 0
    %103 = vmatprep.subr.bf16.mxu0 0
    %104 = vmatpush1.bf16.msra.mxu0 0
    %105 = vmatprep.subr.bf16.mxu0 0
    %106 = vmatpush1.bf16.msra.mxu0 0
    %107 = vmatprep.subr.bf16.mxu0 0
    %108 = vmatpush1.bf16.msra.mxu0 0
    %109 = vmatprep.subr.bf16.mxu0 0
    %110 = vmatpush1.bf16.msra.mxu0 0
    %111 = vmatprep.subr.bf16.mxu0 0
    %112 = vmatpush1.bf16.msra.mxu0 0
    %113 = vmatprep.subr.bf16.mxu0 0
    %114 = vmatpush1.bf16.msra.mxu0 0
    %115 = vmatprep.subr.bf16.mxu0 0
    %116 = vmatpush1.bf16.msra.mxu0 0
    %117 = vmatprep.mubr.bf16.mxu0 0
    %118 = vmatmul.mubr.bf16.gmra.mrb[0].mxu0 %v76
    %v119 = vpop.f32.mrb[0].mxu0
    %v120 = vadd.f32 %v47, %v119
    %v121 = vpop.f32.mrb[0].mxu0
    %v122 = vpop.f32.mrb[0].mxu0
    %v123 = vadd.f32 %v52, %v122
    %v124 = vpop.f32.mrb[0].mxu0
    %125 = vmatprep.mubr.bf16.mxu0 0
    %126 = vmatmul.mubr.bf16.gmra.mrb[0].mxu0 %v79
    %v127 = vpop.f32.mrb[0].mxu0
    %v128 = vadd.f32 %v57, %v127
    %v129 = vpop.f32.mrb[0].mxu0
    %v130 = vpop.f32.mrb[0].mxu0
    %v131 = vadd.f32 %v62, %v130
    %v132 = vpop.f32.mrb[0].mxu0
    %133 = vdwg.mxu0
    %v134 = vmul.f32 %v120, 0.5
    %v135 = vmul.f32 %v123, 0.5
    %v136 = vmul.f32 %v128, 0.5
    %v137 = vmul.f32 %v131, 0.5
    %v138 = vtanh.pop %v134
    %v139 = vtanh.pop %v135
    %v140 = vtanh.pop %v136
    %v141 = vtanh.pop %v137
    %v142 = vadd.f32 %v138, 1.0
    %v143 = vadd.f32 %v139, 1.0
    %v144 = vadd.f32 %v140, 1.0
    %v145 = vadd.f32 %v141, 1.0
    %v146 = vmul.f32 %v142, 0.5
    %v147 = vmul.f32 %v143, 0.5
    %v148 = vmul.f32 %v144, 0.5
    %v149 = vmul.f32 %v145, 0.5
    %v150 = vmul.f32 %v120, %v146
    %v151 = vmul.f32 %v123, %v147
    %v152 = vmul.f32 %v128, %v148
    %v153 = vmul.f32 %v131, %v149
    %v154 = vld [vmem:[%s3] sm:$0xf]
    %v155 = vld [vmem:[%s3 + $0x4] sm:$0xf]
    %v156 = vld [vmem:[%s3 + $0x8] sm:$0xf]
    %v157 = vld [vmem:[%s3 + $0xc] sm:$0xf]
    %v158 = vpack.c.bf16 %v151, %v150
    %v159 = vpack.c.bf16 %v153, %v152
    %v160 = vld [vmem:[%s4] sm:$0xff]
    %v161 = vld [vmem:[%s4 + $0x8] sm:$0xff]
    %v162 = vld [vmem:[%s4 + $0x10] sm:$0xff]
    %v163 = vld [vmem:[%s4 + $0x18] sm:$0xff]
    %165 = vset.pattern.permute.xlu0 0
    %166 = vperm.xlu0 %165, %v160
    %v167 = vpop.permute.xlu0 %166
    %170 = vset.pattern.permute.xlu0 0
    %171 = vperm.xlu0 %170, %v161
    %v172 = vpop.permute.xlu0 %171
    %175 = vset.pattern.permute.xlu0 0
    %176 = vperm.xlu0 %175, %v162
    %v177 = vpop.permute.xlu0 %176
    %180 = vset.pattern.permute.xlu0 0
    %181 = vperm.xlu0 %180, %v163
    %v182 = vpop.permute.xlu0 %181
    %v188 = vunpack.c.l.b16 %v154
    %v189 = vunpack.c.l.b16 %v155
    %v190 = vunpack.c.l.b16 %v156
    %v191 = vunpack.c.l.b16 %v157
    %v192 = vpack.c.b16 %v189, %v188
    %v193 = vpack.c.b16 %v191, %v190
    %vm194 = vcmask 261120
    %v196 = vsel %vm194, %v192, 0
    %v199 = vsel %vm194, %v193, 0
    %201 = vmatprep.subr.bf16.mxu0 0
    %202 = vmatpush1.bf16.msra.mxu0 %v158
    %203 = vmatprep.subr.bf16.mxu0 0
    %204 = vmatpush1.bf16.msra.mxu0 %v159
    %205 = vmatprep.subr.bf16.mxu0 0
    %206 = vmatpush1.bf16.msra.mxu0 0
    %207 = vmatprep.subr.bf16.mxu0 0
    %208 = vmatpush1.bf16.msra.mxu0 0
    %209 = vmatprep.subr.bf16.mxu0 0
    %210 = vmatpush1.bf16.msra.mxu0 0
    %211 = vmatprep.subr.bf16.mxu0 0
    %212 = vmatpush1.bf16.msra.mxu0 0
    %213 = vmatprep.subr.bf16.mxu0 0
    %214 = vmatpush1.bf16.msra.mxu0 0
    %215 = vmatprep.subr.bf16.mxu0 0
    %216 = vmatpush1.bf16.msra.mxu0 0
    %217 = vmatprep.subr.bf16.mxu0 0
    %218 = vmatpush1.bf16.msra.mxu0 0
    %219 = vmatprep.subr.bf16.mxu0 0
    %220 = vmatpush1.bf16.msra.mxu0 0
    %221 = vmatprep.subr.bf16.mxu0 0
    %222 = vmatpush1.bf16.msra.mxu0 0
    %223 = vmatprep.subr.bf16.mxu0 0
    %224 = vmatpush1.bf16.msra.mxu0 0
    %225 = vmatprep.subr.bf16.mxu0 0
    %226 = vmatpush1.bf16.msra.mxu0 0
    %227 = vmatprep.subr.bf16.mxu0 0
    %228 = vmatpush1.bf16.msra.mxu0 0
    %229 = vmatprep.subr.bf16.mxu0 0
    %230 = vmatpush1.bf16.msra.mxu0 0
    %231 = vmatprep.subr.bf16.mxu0 0
    %232 = vmatpush1.bf16.msra.mxu0 0
    %233 = vmatprep.mubr.bf16.mxu0 0
    %234 = vmatmul.mubr.bf16.gmra.mrb[0].mxu0 %v196
    %v235 = vpop.f32.mrb[0].mxu0
    %v236 = vadd.f32 %v167, %v235
    %v237 = vpop.f32.mrb[0].mxu0
    %v238 = vpop.f32.mrb[0].mxu0
    %v239 = vadd.f32 %v172, %v238
    %v240 = vpop.f32.mrb[0].mxu0
    %241 = vmatprep.mubr.bf16.mxu0 0
    %242 = vmatmul.mubr.bf16.gmra.mrb[0].mxu0 %v199
    %v243 = vpop.f32.mrb[0].mxu0
    %v244 = vadd.f32 %v177, %v243
    %v245 = vpop.f32.mrb[0].mxu0
    %v246 = vpop.f32.mrb[0].mxu0
    %v247 = vadd.f32 %v182, %v246
    %v248 = vpop.f32.mrb[0].mxu0
    %249 = vdwg.mxu0
    %v250 = vmul.f32 %v236, 0.5
    %v251 = vmul.f32 %v239, 0.5
    %v252 = vmul.f32 %v244, 0.5
    %v253 = vmul.f32 %v247, 0.5
    %v254 = vtanh.pop %v250
    %v255 = vtanh.pop %v251
    %v256 = vtanh.pop %v252
    %v257 = vtanh.pop %v253
    %v258 = vadd.f32 %v254, 1.0
    %v259 = vadd.f32 %v255, 1.0
    %v260 = vadd.f32 %v256, 1.0
    %v261 = vadd.f32 %v257, 1.0
    %v262 = vmul.f32 %v258, 0.5
    %v263 = vmul.f32 %v259, 0.5
    %v264 = vmul.f32 %v260, 0.5
    %v265 = vmul.f32 %v261, 0.5
    %v266 = vmul.f32 %v236, %v262
    %v267 = vmul.f32 %v239, %v263
    %v268 = vmul.f32 %v244, %v264
    %v269 = vmul.f32 %v247, %v265
    %v270 = vld [vmem:[%s5] sm:$0xf]
    %v271 = vld [vmem:[%s5 + $0x4] sm:$0xf]
    %v272 = vld [vmem:[%s5 + $0x8] sm:$0xf]
    %v273 = vld [vmem:[%s5 + $0xc] sm:$0xf]
    %v274 = vpack.c.bf16 %v267, %v266
    %v275 = vpack.c.bf16 %v269, %v268
    %v276 = vld [vmem:[%s6] sm:$0xff]
    %v277 = vld [vmem:[%s6 + $0x8] sm:$0xff]
    %v278 = vld [vmem:[%s6 + $0x10] sm:$0xff]
    %v279 = vld [vmem:[%s6 + $0x18] sm:$0xff]
    %281 = vset.pattern.permute.xlu0 0
    %282 = vperm.xlu0 %281, %v276
    %v283 = vpop.permute.xlu0 %282
    %286 = vset.pattern.permute.xlu0 0
    %287 = vperm.xlu0 %286, %v277
    %v288 = vpop.permute.xlu0 %287
    %291 = vset.pattern.permute.xlu0 0
    %292 = vperm.xlu0 %291, %v278
    %v293 = vpop.permute.xlu0 %292
    %296 = vset.pattern.permute.xlu0 0
    %297 = vperm.xlu0 %296, %v279
    %v298 = vpop.permute.xlu0 %297
    %v304 = vunpack.c.l.b16 %v270
    %v305 = vunpack.c.l.b16 %v271
    %v306 = vunpack.c.l.b16 %v272
    %v307 = vunpack.c.l.b16 %v273
    %v308 = vpack.c.b16 %v305, %v304
    %v309 = vpack.c.b16 %v307, %v306
    %v311 = vsel %vm194, %v308, 0
    %v314 = vsel %vm194, %v309, 0
    %316 = vmatprep.subr.bf16.mxu0 0
    %317 = vmatpush1.bf16.msra.mxu0 %v274
    %318 = vmatprep.subr.bf16.mxu0 0
    %319 = vmatpush1.bf16.msra.mxu0 %v275
    %320 = vmatprep.subr.bf16.mxu0 0
    %321 = vmatpush1.bf16.msra.mxu0 0
    %322 = vmatprep.subr.bf16.mxu0 0
    %323 = vmatpush1.bf16.msra.mxu0 0
    %324 = vmatprep.subr.bf16.mxu0 0
    %325 = vmatpush1.bf16.msra.mxu0 0
    %326 = vmatprep.subr.bf16.mxu0 0
    %327 = vmatpush1.bf16.msra.mxu0 0
    %328 = vmatprep.subr.bf16.mxu0 0
    %329 = vmatpush1.bf16.msra.mxu0 0
    %330 = vmatprep.subr.bf16.mxu0 0
    %331 = vmatpush1.bf16.msra.mxu0 0
    %332 = vmatprep.subr.bf16.mxu0 0
    %333 = vmatpush1.bf16.msra.mxu0 0
    %334 = vmatprep.subr.bf16.mxu0 0
    %335 = vmatpush1.bf16.msra.mxu0 0
    %336 = vmatprep.subr.bf16.mxu0 0
    %337 = vmatpush1.bf16.msra.mxu0 0
    %338 = vmatprep.subr.bf16.mxu0 0
    %339 = vmatpush1.bf16.msra.mxu0 0
    %340 = vmatprep.subr.bf16.mxu0 0
    %341 = vmatpush1.bf16.msra.mxu0 0
    %342 = vmatprep.subr.bf16.mxu0 0
    %343 = vmatpush1.bf16.msra.mxu0 0
    %344 = vmatprep.subr.bf16.mxu0 0
    %345 = vmatpush1.bf16.msra.mxu0 0
    %346 = vmatprep.subr.bf16.mxu0 0
    %347 = vmatpush1.bf16.msra.mxu0 0
    %348 = vmatprep.mubr.bf16.mxu0 0
    %349 = vmatmul.mubr.bf16.gmra.mrb[0].mxu0 %v311
    %v350 = vpop.f32.mrb[0].mxu0
    %v351 = vadd.f32 %v283, %v350
    %v352 = vpop.f32.mrb[0].mxu0
    %v353 = vpop.f32.mrb[0].mxu0
    %v354 = vadd.f32 %v288, %v353
    %v355 = vpop.f32.mrb[0].mxu0
    %356 = vmatprep.mubr.bf16.mxu0 0
    %357 = vmatmul.mubr.bf16.gmra.mrb[0].mxu0 %v314
    %v358 = vpop.f32.mrb[0].mxu0
    %v359 = vadd.f32 %v293, %v358
    %v360 = vpop.f32.mrb[0].mxu0
    %v361 = vpop.f32.mrb[0].mxu0
    %v362 = vadd.f32 %v298, %v361
    %v363 = vpop.f32.mrb[0].mxu0
    %364 = vdwg.mxu0
    %v365 = vmul.f32 %v351, 0.5
    %v366 = vmul.f32 %v354, 0.5
    %v367 = vmul.f32 %v359, 0.5
    %v368 = vmul.f32 %v362, 0.5
    %v369 = vtanh.pop %v365
    %v370 = vtanh.pop %v366
    %v371 = vtanh.pop %v367
    %v372 = vtanh.pop %v368
    %v373 = vadd.f32 %v369, 1.0
    %v374 = vadd.f32 %v370, 1.0
    %v375 = vadd.f32 %v371, 1.0
    %v376 = vadd.f32 %v372, 1.0
    %v377 = vmul.f32 %v373, 0.5
    %v378 = vmul.f32 %v374, 0.5
    %v379 = vmul.f32 %v375, 0.5
    %v380 = vmul.f32 %v376, 0.5
    %v381 = vmul.f32 %v351, %v377
    %v382 = vmul.f32 %v354, %v378
    %v383 = vmul.f32 %v359, %v379
    %v384 = vmul.f32 %v362, %v380
    %v385 = vld [vmem:[%s7] sm:$0x3]
    %v386 = vpack.c.bf16 %v382, %v381
    %v387 = vpack.c.bf16 %v384, %v383
    %v388 = vld [vmem:[%s8] sm:$0xf]
    %390 = vset.pattern.permute.xlu0 0
    %391 = vperm.xlu0 %390, %v388
    %v392 = vpop.permute.xlu0 %391
    %v395 = vsel %vm194, %v385, 0
    %397 = vmatprep.subr.bf16.mxu0 0
    %398 = vmatpush1.bf16.msra.mxu0 %v386
    %399 = vmatprep.subr.bf16.mxu0 0
    %400 = vmatpush1.bf16.msra.mxu0 %v387
    %401 = vmatprep.subr.bf16.mxu0 0
    %402 = vmatpush1.bf16.msra.mxu0 0
    %403 = vmatprep.subr.bf16.mxu0 0
    %404 = vmatpush1.bf16.msra.mxu0 0
    %405 = vmatprep.subr.bf16.mxu0 0
    %406 = vmatpush1.bf16.msra.mxu0 0
    %407 = vmatprep.subr.bf16.mxu0 0
    %408 = vmatpush1.bf16.msra.mxu0 0
    %409 = vmatprep.subr.bf16.mxu0 0
    %410 = vmatpush1.bf16.msra.mxu0 0
    %411 = vmatprep.subr.bf16.mxu0 0
    %412 = vmatpush1.bf16.msra.mxu0 0
    %413 = vmatprep.subr.bf16.mxu0 0
    %414 = vmatpush1.bf16.msra.mxu0 0
    %415 = vmatprep.subr.bf16.mxu0 0
    %416 = vmatpush1.bf16.msra.mxu0 0
    %417 = vmatprep.subr.bf16.mxu0 0
    %418 = vmatpush1.bf16.msra.mxu0 0
    %419 = vmatprep.subr.bf16.mxu0 0
    %420 = vmatpush1.bf16.msra.mxu0 0
    %421 = vmatprep.subr.bf16.mxu0 0
    %422 = vmatpush1.bf16.msra.mxu0 0
    %423 = vmatprep.subr.bf16.mxu0 0
    %424 = vmatpush1.bf16.msra.mxu0 0
    %425 = vmatprep.subr.bf16.mxu0 0
    %426 = vmatpush1.bf16.msra.mxu0 0
    %427 = vmatprep.subr.bf16.mxu0 0
    %428 = vmatpush1.bf16.msra.mxu0 0
    %429 = vmatprep.mubr.bf16.mxu0 0
    %430 = vmatmul.mubr.bf16.gmra.mrb[0].mxu0 %v395
    %v431 = vpop.f32.mrb[0].mxu0
    %v432 = vadd.f32 %v392, %v431
    %v433 = vpop.f32.mrb[0].mxu0
    %v434 = vpop.f32.mrb[0].mxu0
    %v435 = vpop.f32.mrb[0].mxu0
    %436 = vdwg.mxu0
    %vm437 = vcmask 60416
    %438 = vst.msk [vmem:[#allocation2] sm:$0xf] %vm437, %v432
    // Predicated region
    $region38: #{tpu_custom_call.1} parent=1 // pred_check
      _
    $region39: #{tpu_custom_call.1} parent=1 // pred_check_branch
      %440 = sbr.rel (0) target = $region41
    $region40: #{tpu_custom_call.1} parent=1 // pred_region
      %s442 = ssub.s32 64, 64
      %443 = vsyncadd [#allocation3], %s442
      %s445 = sshll.u32 [#allocation2], 4
      %s446 = int_to_ptr.vmem [resolvable:$true] %s445
      %448 = dma.vmem_to_hbm [thread:$0]  %s446, 64, %s9, [#allocation3]
    $region41: #{tpu_custom_call.1} parent=1 // pred_fallthru
      _
    // Predicated region
    $region42: #{tpu_custom_call.1} parent=1 // pred_check
      _
    $region43: #{tpu_custom_call.1} parent=1 // pred_check_branch
      %450 = sbr.rel (0) target = $region45
    $region44: #{tpu_custom_call.1} parent=1 // pred_region
      %451 = dma.done [#allocation3], 64
    $region45: #{tpu_custom_call.1} parent=1 // pred_fallthru
      _
    %452 = vsyncpa [#allocation3], 1

</llo_original>
